<compile_context>
chip_gen: v7x
topology: tpu7x:2x2x1
jax: 0.10.0
libtpu: 0.0.40
codegen_flags: <defaults>
</compile_context>

<pallas_src>
import functools

import jax
import jax.numpy as jnp
from jax.experimental import pallas as pl
from jax.experimental.pallas import tpu as pltpu


_NEG_BIG = -1e30  # finite "-inf" for masked vocab columns (avoids inf-inf NaNs)


def _round_up(x, m):
    return (x + m - 1) // m * m


def _cdiv(a, b):
    return (a + b - 1) // b


def mlm_kernel(x_ref, w_ref, b_ref, o_ref, m_ref, l_ref, *, vocab):
    """One (row_tile, vocab_tile) step of the vocab-tiled log-softmax MLM head.

    x_ref: (tm, hidden) bf16        w_ref: (tv, hidden) bf16  (native layout)
    b_ref: (1, tv) f32              o_ref: (tm, Vp) out_dtype (row-resident)
    m_ref/l_ref: (tm, 1) f32 scratch = running max / running sum-exp
    """
    j = pl.program_id(1)
    nj = pl.num_programs(1)
    tv = w_ref.shape[0]

    @pl.when(j == 0)
    def _init():
        m_ref[...] = jnp.full(m_ref.shape, -jnp.inf, m_ref.dtype)
        l_ref[...] = jnp.zeros(l_ref.shape, l_ref.dtype)

    # (tm, hidden) x (tv, hidden) contracted on hidden -> (tm, tv) on the MXU,
    # bf16 operands, f32 accumulation; no materialized transpose of W.
    logits = jax.lax.dot_general(
        x_ref[...], w_ref[...],
        dimension_numbers=(((1,), (1,)), ((), ())),
        preferred_element_type=jnp.float32)
    logits = logits + b_ref[...]

    # Mask columns past the true vocab (garbage from the partial last W tile).
    col = j * tv + jax.lax.broadcasted_iota(jnp.int32, logits.shape, 1)
    logits = jnp.where(col < vocab, logits, _NEG_BIG)

    # Online log-sum-exp update (numerically stable, f32).
    m_prev = m_ref[...]
    m_new = jnp.maximum(m_prev, jnp.max(logits, axis=-1, keepdims=True))
    l_ref[...] = (l_ref[...] * jnp.exp(m_prev - m_new)
                  + jnp.sum(jnp.exp(logits - m_new), axis=-1, keepdims=True))
    m_ref[...] = m_new

    # Lane-aligned dense store of this vocab tile's raw logits.
    col0 = pl.multiple_of(j * tv, 128)
    o_ref[:, pl.ds(col0, tv)] = logits.astype(o_ref.dtype)

    # Last vocab tile: subtract lse = m + log(l) from the whole resident row block.
    @pl.when(j == nj - 1)
    def _finalize():
        lse = m_ref[...] + jnp.log(l_ref[...])                      # (tm, 1) f32
        o_ref[...] = (o_ref[...].astype(jnp.float32) - lse).astype(o_ref.dtype)


def masked_language_model(x, w, b, *, tm=None, tv=None,
                          out_dtype=jnp.float32, vmem_limit_bytes=None):
    """log_softmax(x @ w.T + b, axis=-1) via a vocab-tiled Pallas TPU kernel.

    x: (batch, seq, hidden);  w: (vocab, hidden);  b: (vocab,)
    out_dtype=jnp.bfloat16 is the recommended perf setting at real vocab sizes
    (halves HBM writeback + resident VMEM); log-prob abs error grows to ~1e-2.
    """
    batch, seq, hidden = x.shape
    vocab, hidden_w = w.shape
    assert hidden_w == hidden, (hidden_w, hidden)
    M = batch * seq
    out_bytes = jnp.dtype(out_dtype).itemsize

    # --- vocab tile: default 1024 (fewer, longer inner steps), multiple of 128.
    if tv is None:
        tv = 1024
    tv = max(128, min(_round_up(int(tv), 128), _round_up(vocab, 128)))
    nj = _cdiv(vocab, tv)
    Vp = nj * tv                       # width of the row-resident output block

    # --- VMEM budget: query the chip, keep ~25% headroom for compiler scratch.
    if vmem_limit_bytes is None:
        try:
            cap = pltpu.get_tpu_info().vmem_capacity_bytes
        except Exception:
            cap = 64 * 1024 * 1024     # conservative (v7x-sized) fallback
        vmem_limit_bytes = int(cap) * 3 // 4
    vmem_limit_bytes = int(vmem_limit_bytes)

    # --- row tile: largest tm whose resident output block (double-buffered
    #     across the parallel row axis) plus streamed tiles fit the budget.
    fixed = 2 * tv * hidden * 2 + 2 * tv * 4 + (1 << 20)       # W + bias tiles + slack
    per_row = 2 * Vp * out_bytes + 2 * hidden * 2 + 16         # out + x tiles + scratch
    tm_fit = (vmem_limit_bytes - fixed) // per_row
    if tm is None:
        tm = min(512, tm_fit)          # 512 ~ v6e sweet spot; smaller budget shrinks it
    tm = max(8, min(int(tm), _round_up(M, 8)))
    tm = (tm // 8) * 8
    ni = _cdiv(M, tm)

    # --- operands: bf16 MXU inputs (cast skipped if already bf16), f32 bias.
    #     No transpose, no padding of W or b.
    x2 = x.reshape(M, hidden)
    if x2.dtype != jnp.bfloat16:
        x2 = x2.astype(jnp.bfloat16)
    w2 = w if w.dtype == jnp.bfloat16 else w.astype(jnp.bfloat16)
    b2 = b.reshape(1, vocab).astype(jnp.float32)

    cost = pl.CostEstimate(
        flops=int(2 * M * Vp * hidden + 4 * M * Vp),
        transcendentals=int(M * Vp),
        bytes_accessed=int(M * hidden * 2          # x read (bf16)
                           + ni * vocab * hidden * 2  # W re-streamed per row tile
                           + vocab * 4                # bias
                           + 2 * M * Vp * out_bytes), # output store + finalize rewrite
    )

    out2 = pl.pallas_call(
        functools.partial(mlm_kernel, vocab=vocab),
        out_shape=jax.ShapeDtypeStruct((M, vocab), out_dtype),
        grid_spec=pltpu.PrefetchScalarGridSpec(
            num_scalar_prefetch=0,
            grid=(ni, nj),                                   # rows outer, vocab inner
            in_specs=[
                pl.BlockSpec((tm, hidden), lambda i, j: (i, 0)),  # x row tile
                pl.BlockSpec((tv, hidden), lambda i, j: (j, 0)),  # native-layout W tile
                pl.BlockSpec((1, tv), lambda i, j: (0, j)),       # bias tile
            ],
            # Same block index for every j -> output block stays VMEM-resident
            # across the whole vocab reduction for this row tile.
            out_specs=pl.BlockSpec((tm, Vp), lambda i, j: (i, 0)),
            scratch_shapes=[pltpu.VMEM((tm, 1), jnp.float32),     # running max
                            pltpu.VMEM((tm, 1), jnp.float32)],    # running sum-exp
        ),
        compiler_params=pltpu.CompilerParams(
            dimension_semantics=("parallel", "arbitrary"),
            vmem_limit_bytes=vmem_limit_bytes,
        ),
        cost_estimate=cost,
    )(x2, w2, b2)

    return out2.reshape(batch, seq, vocab)


if __name__ == "__main__":
    # Small shapes consistent with the module; vocab=500 / M=10 deliberately
    # exercise partial edge blocks, the vocab-tail mask and the online LSE.
    batch, seq, hidden, vocab = 2, 5, 32, 500

    key = jax.random.PRNGKey(0)
    kx, kw, kb = jax.random.split(key, 3)
    bound = 1.0 / (hidden ** 0.5)
    w = jax.random.uniform(kw, (vocab, hidden), jnp.float32, -bound, bound)
    b = jax.random.uniform(kb, (vocab,), jnp.float32, -bound, bound)
    x = jax.random.normal(kx, (batch, seq, hidden), jnp.float32)

    # Reference through the same bf16-matmul / f32-softmax path.
    logits_ref = jnp.dot(x.astype(jnp.bfloat16).reshape(-1, hidden),
                         w.T.astype(jnp.bfloat16),
                         preferred_element_type=jnp.float32) + b
    ref = jax.nn.log_softmax(logits_ref, axis=-1).reshape(batch, seq, vocab)

    # 1) size-aware defaults (single tile here), f32 output = module semantics.
    out_f32 = jax.block_until_ready(masked_language_model(x, w, b))
    # 2) forced multi-tile path: ni=2 row tiles, nj=4 vocab tiles, online LSE.
    out_tiled = jax.block_until_ready(masked_language_model(x, w, b, tm=8, tv=128))
    # 3) bf16-output perf config (recommended at real vocab sizes).
    out_bf16 = jax.block_until_ready(
        masked_language_model(x, w, b, tm=8, tv=128, out_dtype=jnp.bfloat16))

    assert out_f32.shape == (batch, seq, vocab)
    assert out_tiled.shape == (batch, seq, vocab)
    for out in (out_f32, out_tiled):
        err = float(jnp.max(jnp.abs(out - ref)))
        assert jnp.allclose(out, ref, atol=2e-3, rtol=2e-3), err
    err_bf16 = float(jnp.max(jnp.abs(out_bf16.astype(jnp.float32) - ref)))
    assert err_bf16 < 8e-2, err_bf16

    print("KERNEL_OK")
</pallas_src>

<mosaic_0001>
module attributes {stable_mosaic.version = 11 : i64} {
  func.func @mlm_kernel(%arg0: i32, %arg1: i32, %arg2: memref<16x32xbf16, #tpu.memory_space<vmem>>, %arg3: memref<512x32xbf16, #tpu.memory_space<vmem>>, %arg4: memref<1x512xf32, #tpu.memory_space<vmem>>, %arg5: memref<16x512xf32, #tpu.memory_space<vmem>>, %arg6: memref<16x1xf32, #tpu.memory_space<vmem>>, %arg7: memref<16x1xf32, #tpu.memory_space<vmem>>) attributes {dimension_semantics = [#tpu.dimension_semantics<parallel>, #tpu.dimension_semantics<arbitrary>], iteration_bounds = array<i64: 1, 1>, scalar_prefetch = 0 : i64, scratch_operands = 2 : i64, tpu.core_type = #tpu.core_type<tc>, window_params = [{transform_indices = @transform_0, window_bounds = array<i64: 16, 32>}, {transform_indices = @transform_1, window_bounds = array<i64: 512, 32>}, {transform_indices = @transform_2, window_bounds = array<i64: 1, 512>}, {transform_indices = @transform_3, window_bounds = array<i64: 16, 512>}]} {
    %c0_i32 = arith.constant 0 : i32
    %0 = arith.cmpi eq, %arg1, %c0_i32 : i32
    %1 = arith.extui %0 : i1 to i32
    %c0_i32_0 = arith.constant 0 : i32
    %2 = arith.cmpi ne, %1, %c0_i32_0 : i32
    scf.if %2 {
      %cst_21 = arith.constant 0xFF800000 : f32
      %40 = vector.broadcast %cst_21 : f32 to vector<16x1xf32>
      %c0_22 = arith.constant 0 : index
      %c0_23 = arith.constant 0 : index
      %41 = vector.load %arg6[%c0_22, %c0_23] : memref<16x1xf32, #tpu.memory_space<vmem>>, vector<16x1xf32>
      tpu.vector_store %arg6[%c0_22, %c0_23], %40 {strides = array<i32>} : memref<16x1xf32, #tpu.memory_space<vmem>>, vector<16x1xf32>,
      %cst_24 = arith.constant 0.000000e+00 : f32
      %42 = vector.broadcast %cst_24 : f32 to vector<16x1xf32>
      %c0_25 = arith.constant 0 : index
      %c0_26 = arith.constant 0 : index
      %43 = vector.load %arg7[%c0_25, %c0_26] : memref<16x1xf32, #tpu.memory_space<vmem>>, vector<16x1xf32>
      tpu.vector_store %arg7[%c0_25, %c0_26], %42 {strides = array<i32>} : memref<16x1xf32, #tpu.memory_space<vmem>>, vector<16x1xf32>,
    } else {
    }
    %c0 = arith.constant 0 : index
    %c0_1 = arith.constant 0 : index
    %3 = vector.load %arg2[%c0, %c0_1] : memref<16x32xbf16, #tpu.memory_space<vmem>>, vector<16x32xbf16>
    %c0_2 = arith.constant 0 : index
    %c0_3 = arith.constant 0 : index
    %4 = vector.load %arg3[%c0_2, %c0_3] : memref<512x32xbf16, #tpu.memory_space<vmem>>, vector<512x32xbf16>
    %cst = arith.constant dense<0.000000e+00> : vector<16x512xf32>
    %5 = tpu.matmul %3, %4, %cst {dimension_numbers = #tpu.dot_dimension_numbers<[1], [1], [0], [0], [0, 0, 1, 0], [], []>} : vector<16x32xbf16>, vector<512x32xbf16>, vector<16x512xf32> -> vector<16x512xf32>
    %c0_4 = arith.constant 0 : index
    %c0_5 = arith.constant 0 : index
    %6 = vector.load %arg4[%c0_4, %c0_5] : memref<1x512xf32, #tpu.memory_space<vmem>>, vector<1x512xf32>
    %7 = vector.broadcast %6 : vector<1x512xf32> to vector<16x512xf32>
    %8 = arith.addf %5, %7 : vector<16x512xf32>
    %c512_i32 = arith.constant 512 : i32
    %9 = arith.muli %arg1, %c512_i32 : i32
    %10 = tpu.iota {dimensions = array<i32: 1>} : vector<16x512xi32>
    %11 = vector.broadcast %9 : i32 to vector<16x512xi32>
    %12 = arith.addi %11, %10 : vector<16x512xi32>
    %c500_i32 = arith.constant 500 : i32
    %13 = vector.broadcast %c500_i32 : i32 to vector<16x512xi32>
    %14 = arith.cmpi slt, %12, %13 : vector<16x512xi32>
    %cst_6 = arith.constant -1.000000e+30 : f32
    %15 = vector.broadcast %cst_6 : f32 to vector<16x512xf32>
    %16 = arith.select %14, %8, %15 : vector<16x512xi1>, vector<16x512xf32>
    %c0_7 = arith.constant 0 : index
    %c0_8 = arith.constant 0 : index
    %17 = vector.load %arg6[%c0_7, %c0_8] : memref<16x1xf32, #tpu.memory_space<vmem>>, vector<16x1xf32>
    %cst_9 = arith.constant dense<0xFF800000> : vector<16xf32>
    %18 = vector.multi_reduction <maximumf>, %16, %cst_9 [1] : vector<16x512xf32> to vector<16xf32>
    %19 = vector.shape_cast %18 : vector<16xf32> to vector<16x1xf32>
    %20 = arith.maximumf %17, %19 : vector<16x1xf32>
    %c0_10 = arith.constant 0 : index
    %c0_11 = arith.constant 0 : index
    %21 = vector.load %arg7[%c0_10, %c0_11] : memref<16x1xf32, #tpu.memory_space<vmem>>, vector<16x1xf32>
    %22 = arith.subf %17, %20 : vector<16x1xf32>
    %23 = math.exp %22 : vector<16x1xf32>
    %24 = arith.mulf %21, %23 : vector<16x1xf32>
    %25 = vector.broadcast %20 : vector<16x1xf32> to vector<16x512xf32>
    %26 = arith.subf %16, %25 : vector<16x512xf32>
    %27 = math.exp %26 : vector<16x512xf32>
    %cst_12 = arith.constant dense<0.000000e+00> : vector<16xf32>
    %28 = vector.multi_reduction <add>, %27, %cst_12 [1] : vector<16x512xf32> to vector<16xf32>
    %29 = vector.shape_cast %28 : vector<16xf32> to vector<16x1xf32>
    %30 = arith.addf %24, %29 : vector<16x1xf32>
    %c0_13 = arith.constant 0 : index
    %c0_14 = arith.constant 0 : index
    %31 = vector.load %arg7[%c0_13, %c0_14] : memref<16x1xf32, #tpu.memory_space<vmem>>, vector<16x1xf32>
    tpu.vector_store %arg7[%c0_13, %c0_14], %30 {strides = array<i32>} : memref<16x1xf32, #tpu.memory_space<vmem>>, vector<16x1xf32>,
    %c0_15 = arith.constant 0 : index
    %c0_16 = arith.constant 0 : index
    %32 = vector.load %arg6[%c0_15, %c0_16] : memref<16x1xf32, #tpu.memory_space<vmem>>, vector<16x1xf32>
    tpu.vector_store %arg6[%c0_15, %c0_16], %20 {strides = array<i32>} : memref<16x1xf32, #tpu.memory_space<vmem>>, vector<16x1xf32>,
    %c512_i32_17 = arith.constant 512 : i32
    %33 = arith.muli %arg1, %c512_i32_17 : i32
    %34 = tpu.assume_multiple %33, 128 : i32
    %c0_18 = arith.constant 0 : index
    %35 = arith.index_cast %34 : i32 to index
    %36 = vector.load %arg5[%c0_18, %35] : memref<16x512xf32, #tpu.memory_space<vmem>>, vector<16x512xf32>
    tpu.vector_store %arg5[%c0_18, %35], %16 {strides = array<i32>} : memref<16x512xf32, #tpu.memory_space<vmem>>, vector<16x512xf32>,
    %c0_i32_19 = arith.constant 0 : i32
    %37 = arith.cmpi eq, %arg1, %c0_i32_19 : i32
    %38 = arith.extui %37 : i1 to i32
    %c0_i32_20 = arith.constant 0 : i32
    %39 = arith.cmpi ne, %38, %c0_i32_20 : i32
    scf.if %39 {
      %c0_21 = arith.constant 0 : index
      %c0_22 = arith.constant 0 : index
      %40 = vector.load %arg6[%c0_21, %c0_22] : memref<16x1xf32, #tpu.memory_space<vmem>>, vector<16x1xf32>
      %c0_23 = arith.constant 0 : index
      %c0_24 = arith.constant 0 : index
      %41 = vector.load %arg7[%c0_23, %c0_24] : memref<16x1xf32, #tpu.memory_space<vmem>>, vector<16x1xf32>
      %42 = math.log %41 : vector<16x1xf32>
      %43 = arith.addf %40, %42 : vector<16x1xf32>
      %c0_25 = arith.constant 0 : index
      %c0_26 = arith.constant 0 : index
      %44 = vector.load %arg5[%c0_25, %c0_26] : memref<16x512xf32, #tpu.memory_space<vmem>>, vector<16x512xf32>
      %45 = vector.broadcast %43 : vector<16x1xf32> to vector<16x512xf32>
      %46 = arith.subf %44, %45 : vector<16x512xf32>
      %c0_27 = arith.constant 0 : index
      %c0_28 = arith.constant 0 : index
      %47 = vector.load %arg5[%c0_27, %c0_28] : memref<16x512xf32, #tpu.memory_space<vmem>>, vector<16x512xf32>
      tpu.vector_store %arg5[%c0_27, %c0_28], %46 {strides = array<i32>} : memref<16x512xf32, #tpu.memory_space<vmem>>, vector<16x512xf32>,
    } else {
    }
    return
  }
  func.func @transform_0(%arg0: i32, %arg1: i32) -> (i32, i32) {
    %c0_i32 = arith.constant 0 : i32
    %c0_i32_0 = arith.constant 0 : i32
    return %arg0, %c0_i32 : i32, i32
  }
  func.func @transform_1(%arg0: i32, %arg1: i32) -> (i32, i32) {
    %c0_i32 = arith.constant 0 : i32
    %c0_i32_0 = arith.constant 0 : i32
    return %arg1, %c0_i32 : i32, i32
  }
  func.func @transform_2(%arg0: i32, %arg1: i32) -> (i32, i32) {
    %c0_i32 = arith.constant 0 : i32
    %c0_i32_0 = arith.constant 0 : i32
    return %c0_i32, %arg1 : i32, i32
  }
  func.func @transform_3(%arg0: i32, %arg1: i32) -> (i32, i32) {
    %c0_i32 = arith.constant 0 : i32
    %c0_i32_0 = arith.constant 0 : i32
    return %arg0, %c0_i32 : i32, i32
  }
}

</mosaic_0001>

<llo_original>
// kernel: tpu_custom_call.1
$region0: #{tpu_custom_call.1}
  #allocation0 [shape = 'u32[]', space=smem, size = 0x4, offset = 0x4, fixed_abs, tag = 'smem constant byte address 0x4 - core index']
  #allocation1 [shape = 'u32[144,128]{1,0:T(1,128)}', space=vmem, size = 0x12000, scoped, tag = 'internal scratch']
  #allocation2 [shape = 'f32[16,1]{1,0:T(8,128)}', space=vmem, size = 0x2000, scoped, tag = 'scratch operand']
  #allocation3 [shape = 'f32[16,1]{1,0:T(8,128)}', space=vmem, size = 0x2000, scoped, tag = 'scratch operand']
  %s0 = inlined_call_operand.vmem [shape: bf16[10,32], index: 0, kind: input, shape index: {}]
  %s1 = inlined_call_operand.vmem [shape: bf16[500,32], index: 1, kind: input, shape index: {}]
  %s2 = inlined_call_operand.vmem [shape: f32[1,500], index: 2, kind: input, shape index: {}]
  %s3 = inlined_call_operand.hbm [shape: f32[10,500], index: 3, kind: output, shape index: {}]
  %s4 = sld [smem:[#allocation0]]
  $region30: #{tpu_custom_call.1} parent=0
    _
  %s6 = ssub.s32 1, %s4
  %s7 = scalar_select 0, %s6, %s4
  $region1: #{tpu_custom_call.1} parent=0
    #allocation4 [shape = 'u8[32768]{0}', space=vmem, size = 0x8000, scoped, tag = 'output window, operand 0, single buffered']
    #allocation5 [shape = 's32[1]{0}', space=sflag, size = 0x4, scoped, tag = 'scoped memory for tpu_custom_call.1']
    %8 = vsyncpa [#allocation5], 0
    // Predicated region
    $region2: #{tpu_custom_call.1} parent=1 // pred_check
      _
    $region3: #{tpu_custom_call.1} parent=1 // pred_check_branch
      %10 = sbr.rel (0) target = $region5
    $region4: #{tpu_custom_call.1} parent=1 // pred_region
      _
    $region5: #{tpu_custom_call.1} parent=1 // pred_fallthru
      _
    // Predicated region
    $region6: #{tpu_custom_call.1} parent=1 // pred_check
      _
    $region7: #{tpu_custom_call.1} parent=1 // pred_check_branch
      %12 = sbr.rel (0) target = $region9
    $region8: #{tpu_custom_call.1} parent=1 // pred_region
      _
    $region9: #{tpu_custom_call.1} parent=1 // pred_fallthru
      _
    // Predicated region
    $region10: #{tpu_custom_call.1} parent=1 // pred_check
      _
    $region11: #{tpu_custom_call.1} parent=1 // pred_check_branch
      %14 = sbr.rel (0) target = $region13
    $region12: #{tpu_custom_call.1} parent=1 // pred_region
      _
    $region13: #{tpu_custom_call.1} parent=1 // pred_fallthru
      _
    %p16 = scmp.eq.s32.totalorder 0, 0
    // Predicated region
    $region14: #{tpu_custom_call.1} parent=1 // pred_check
      %p17 = pneg %p16
    $region15: #{tpu_custom_call.1} parent=1 // pred_check_branch
      %19 = sbr.rel (%p17) target = $region17
    $region16: #{tpu_custom_call.1} parent=1 // pred_region
      %vm20 = vcmask 7168
      %21 = vst.msk [vmem:[#allocation2] sm:$0xff] %vm20, -inf
      %22 = vst.msk [vmem:[#allocation2 + $0x8] sm:$0xff] %vm20, -inf
      %23 = vst.msk [vmem:[#allocation3] sm:$0xff] %vm20, 0.0
      %24 = vst.msk [vmem:[#allocation3 + $0x8] sm:$0xff] %vm20, 0.0
    $region17: #{tpu_custom_call.1} parent=1 // pred_fallthru
      _
    %v25 = vld [vmem:[%s0] sm:$0xf]
    %v26 = vld [vmem:[%s0 + $0x4] sm:$0xf]
    %v27 = vld [vmem:[%s1] sm:$0xf]
    %v28 = vld [vmem:[%s1 + $0x4] sm:$0xf]
    %v29 = vld [vmem:[%s1 + $0x8] sm:$0xf]
    %v30 = vld [vmem:[%s1 + $0xc] sm:$0xf]
    %v31 = vld [vmem:[%s1 + $0x10] sm:$0xf]
    %v32 = vld [vmem:[%s1 + $0x14] sm:$0xf]
    %v33 = vld [vmem:[%s1 + $0x18] sm:$0xf]
    %v34 = vld [vmem:[%s1 + $0x1c] sm:$0xf]
    %v35 = vld [vmem:[%s1 + $0x20] sm:$0xf]
    %v36 = vld [vmem:[%s1 + $0x24] sm:$0xf]
    %v37 = vld [vmem:[%s1 + $0x28] sm:$0xf]
    %v38 = vld [vmem:[%s1 + $0x2c] sm:$0xf]
    %v39 = vld [vmem:[%s1 + $0x30] sm:$0xf]
    %v40 = vld [vmem:[%s1 + $0x34] sm:$0xf]
    %v41 = vld [vmem:[%s1 + $0x38] sm:$0xf]
    %v42 = vld [vmem:[%s1 + $0x3c] sm:$0xf]
    %v43 = vld [vmem:[%s1 + $0x40] sm:$0xf]
    %v44 = vld [vmem:[%s1 + $0x44] sm:$0xf]
    %v45 = vld [vmem:[%s1 + $0x48] sm:$0xf]
    %v46 = vld [vmem:[%s1 + $0x4c] sm:$0xf]
    %v47 = vld [vmem:[%s1 + $0x50] sm:$0xf]
    %v48 = vld [vmem:[%s1 + $0x54] sm:$0xf]
    %v49 = vld [vmem:[%s1 + $0x58] sm:$0xf]
    %v50 = vld [vmem:[%s1 + $0x5c] sm:$0xf]
    %v51 = vld [vmem:[%s1 + $0x60] sm:$0xf]
    %v52 = vld [vmem:[%s1 + $0x64] sm:$0xf]
    %v53 = vld [vmem:[%s1 + $0x68] sm:$0xf]
    %v54 = vld [vmem:[%s1 + $0x6c] sm:$0xf]
    %v55 = vld [vmem:[%s1 + $0x70] sm:$0xf]
    %v56 = vld [vmem:[%s1 + $0x74] sm:$0xf]
    %v57 = vld [vmem:[%s1 + $0x78] sm:$0xf]
    %v58 = vld [vmem:[%s1 + $0x7c] sm:$0xf]
    %v59 = vld [vmem:[%s1 + $0x80] sm:$0xf]
    %v60 = vld [vmem:[%s1 + $0x84] sm:$0xf]
    %v61 = vld [vmem:[%s1 + $0x88] sm:$0xf]
    %v62 = vld [vmem:[%s1 + $0x8c] sm:$0xf]
    %v63 = vld [vmem:[%s1 + $0x90] sm:$0xf]
    %v64 = vld [vmem:[%s1 + $0x94] sm:$0xf]
    %v65 = vld [vmem:[%s1 + $0x98] sm:$0xf]
    %v66 = vld [vmem:[%s1 + $0x9c] sm:$0xf]
    %v67 = vld [vmem:[%s1 + $0xa0] sm:$0xf]
    %v68 = vld [vmem:[%s1 + $0xa4] sm:$0xf]
    %v69 = vld [vmem:[%s1 + $0xa8] sm:$0xf]
    %v70 = vld [vmem:[%s1 + $0xac] sm:$0xf]
    %v71 = vld [vmem:[%s1 + $0xb0] sm:$0xf]
    %v72 = vld [vmem:[%s1 + $0xb4] sm:$0xf]
    %v73 = vld [vmem:[%s1 + $0xb8] sm:$0xf]
    %v74 = vld [vmem:[%s1 + $0xbc] sm:$0xf]
    %v75 = vld [vmem:[%s1 + $0xc0] sm:$0xf]
    %v76 = vld [vmem:[%s1 + $0xc4] sm:$0xf]
    %v77 = vld [vmem:[%s1 + $0xc8] sm:$0xf]
    %v78 = vld [vmem:[%s1 + $0xcc] sm:$0xf]
    %v79 = vld [vmem:[%s1 + $0xd0] sm:$0xf]
    %v80 = vld [vmem:[%s1 + $0xd4] sm:$0xf]
    %v81 = vld [vmem:[%s1 + $0xd8] sm:$0xf]
    %v82 = vld [vmem:[%s1 + $0xdc] sm:$0xf]
    %v83 = vld [vmem:[%s1 + $0xe0] sm:$0xf]
    %v84 = vld [vmem:[%s1 + $0xe4] sm:$0xf]
    %v85 = vld [vmem:[%s1 + $0xe8] sm:$0xf]
    %v86 = vld [vmem:[%s1 + $0xec] sm:$0xf]
    %v87 = vld [vmem:[%s1 + $0xf0] sm:$0xf]
    %v88 = vld [vmem:[%s1 + $0xf4] sm:$0xf]
    %v89 = vld [vmem:[%s1 + $0xf8] sm:$0xf]
    %v90 = vld [vmem:[%s1 + $0xfc] sm:$0xf]
    %v91 = vld [vmem:[%s2] sm:$0xf]
    %v93 = vlaneseq
    %v94 = vshrl.u32 %v93, 7
    %v95 = vsub.s32 0, %v94
    %v96 = vrot.slane %v91, %v95
    %v97 = vlaneseq
    %v98 = vshrl.u32 %v97, 7
    %v99 = vsub.s32 1, %v98
    %v100 = vrot.slane %v91, %v99
    %v101 = vlaneseq
    %v102 = vshrl.u32 %v101, 7
    %v103 = vsub.s32 2, %v102
    %v104 = vrot.slane %v91, %v103
    %v105 = vlaneseq
    %v106 = vshrl.u32 %v105, 7
    %v107 = vsub.s32 3, %v106
    %v108 = vrot.slane %v91, %v107
    %v115 = vunpack.c.l.b16 %v25
    %v116 = vunpack.c.l.b16 %v26
    %v117 = vpack.c.b16 %v116, %v115
    %v182 = vunpack.c.l.b16 %v27
    %v183 = vunpack.c.l.b16 %v28
    %v184 = vunpack.c.l.b16 %v29
    %v185 = vunpack.c.l.b16 %v30
    %v186 = vunpack.c.l.b16 %v31
    %v187 = vunpack.c.l.b16 %v32
    %v188 = vunpack.c.l.b16 %v33
    %v189 = vunpack.c.l.b16 %v34
    %v190 = vunpack.c.l.b16 %v35
    %v191 = vunpack.c.l.b16 %v36
    %v192 = vunpack.c.l.b16 %v37
    %v193 = vunpack.c.l.b16 %v38
    %v194 = vunpack.c.l.b16 %v39
    %v195 = vunpack.c.l.b16 %v40
    %v196 = vunpack.c.l.b16 %v41
    %v197 = vunpack.c.l.b16 %v42
    %v198 = vunpack.c.l.b16 %v43
    %v199 = vunpack.c.l.b16 %v44
    %v200 = vunpack.c.l.b16 %v45
    %v201 = vunpack.c.l.b16 %v46
    %v202 = vunpack.c.l.b16 %v47
    %v203 = vunpack.c.l.b16 %v48
    %v204 = vunpack.c.l.b16 %v49
    %v205 = vunpack.c.l.b16 %v50
    %v206 = vunpack.c.l.b16 %v51
    %v207 = vunpack.c.l.b16 %v52
    %v208 = vunpack.c.l.b16 %v53
    %v209 = vunpack.c.l.b16 %v54
    %v210 = vunpack.c.l.b16 %v55
    %v211 = vunpack.c.l.b16 %v56
    %v212 = vunpack.c.l.b16 %v57
    %v213 = vunpack.c.l.b16 %v58
    %v214 = vunpack.c.l.b16 %v59
    %v215 = vunpack.c.l.b16 %v60
    %v216 = vunpack.c.l.b16 %v61
    %v217 = vunpack.c.l.b16 %v62
    %v218 = vunpack.c.l.b16 %v63
    %v219 = vunpack.c.l.b16 %v64
    %v220 = vunpack.c.l.b16 %v65
    %v221 = vunpack.c.l.b16 %v66
    %v222 = vunpack.c.l.b16 %v67
    %v223 = vunpack.c.l.b16 %v68
    %v224 = vunpack.c.l.b16 %v69
    %v225 = vunpack.c.l.b16 %v70
    %v226 = vunpack.c.l.b16 %v71
    %v227 = vunpack.c.l.b16 %v72
    %v228 = vunpack.c.l.b16 %v73
    %v229 = vunpack.c.l.b16 %v74
    %v230 = vunpack.c.l.b16 %v75
    %v231 = vunpack.c.l.b16 %v76
    %v232 = vunpack.c.l.b16 %v77
    %v233 = vunpack.c.l.b16 %v78
    %v234 = vunpack.c.l.b16 %v79
    %v235 = vunpack.c.l.b16 %v80
    %v236 = vunpack.c.l.b16 %v81
    %v237 = vunpack.c.l.b16 %v82
    %v238 = vunpack.c.l.b16 %v83
    %v239 = vunpack.c.l.b16 %v84
    %v240 = vunpack.c.l.b16 %v85
    %v241 = vunpack.c.l.b16 %v86
    %v242 = vunpack.c.l.b16 %v87
    %v243 = vunpack.c.l.b16 %v88
    %v244 = vunpack.c.l.b16 %v89
    %v245 = vunpack.c.l.b16 %v90
    %v246 = vpack.c.b16 %v183, %v182
    %v247 = vpack.c.b16 %v185, %v184
    %v248 = vpack.c.b16 %v187, %v186
    %v249 = vpack.c.b16 %v189, %v188
    %v250 = vpack.c.b16 %v191, %v190
    %v251 = vpack.c.b16 %v193, %v192
    %v252 = vpack.c.b16 %v195, %v194
    %v253 = vpack.c.b16 %v197, %v196
    %v254 = vpack.c.b16 %v199, %v198
    %v255 = vpack.c.b16 %v201, %v200
    %v256 = vpack.c.b16 %v203, %v202
    %v257 = vpack.c.b16 %v205, %v204
    %v258 = vpack.c.b16 %v207, %v206
    %v259 = vpack.c.b16 %v209, %v208
    %v260 = vpack.c.b16 %v211, %v210
    %v261 = vpack.c.b16 %v213, %v212
    %v262 = vpack.c.b16 %v215, %v214
    %v263 = vpack.c.b16 %v217, %v216
    %v264 = vpack.c.b16 %v219, %v218
    %v265 = vpack.c.b16 %v221, %v220
    %v266 = vpack.c.b16 %v223, %v222
    %v267 = vpack.c.b16 %v225, %v224
    %v268 = vpack.c.b16 %v227, %v226
    %v269 = vpack.c.b16 %v229, %v228
    %v270 = vpack.c.b16 %v231, %v230
    %v271 = vpack.c.b16 %v233, %v232
    %v272 = vpack.c.b16 %v235, %v234
    %v273 = vpack.c.b16 %v237, %v236
    %v274 = vpack.c.b16 %v239, %v238
    %v275 = vpack.c.b16 %v241, %v240
    %v276 = vpack.c.b16 %v243, %v242
    %v277 = vpack.c.b16 %v245, %v244
    %vm278 = vcmask 261120
    %v280 = vsel %vm278, %v117, 0
    %v283 = vsel %vm278, %v246, 0
    %v286 = vsel %vm278, %v247, 0
    %v289 = vsel %vm278, %v248, 0
    %v292 = vsel %vm278, %v249, 0
    %v295 = vsel %vm278, %v250, 0
    %v298 = vsel %vm278, %v251, 0
    %v301 = vsel %vm278, %v252, 0
    %v304 = vsel %vm278, %v253, 0
    %v307 = vsel %vm278, %v254, 0
    %v310 = vsel %vm278, %v255, 0
    %v313 = vsel %vm278, %v256, 0
    %v316 = vsel %vm278, %v257, 0
    %v319 = vsel %vm278, %v258, 0
    %v322 = vsel %vm278, %v259, 0
    %v325 = vsel %vm278, %v260, 0
    %v328 = vsel %vm278, %v261, 0
    %v331 = vsel %vm278, %v262, 0
    %v334 = vsel %vm278, %v263, 0
    %v337 = vsel %vm278, %v264, 0
    %v340 = vsel %vm278, %v265, 0
    %v343 = vsel %vm278, %v266, 0
    %v346 = vsel %vm278, %v267, 0
    %v349 = vsel %vm278, %v268, 0
    %v352 = vsel %vm278, %v269, 0
    %v355 = vsel %vm278, %v270, 0
    %v358 = vsel %vm278, %v271, 0
    %v361 = vsel %vm278, %v272, 0
    %v364 = vsel %vm278, %v273, 0
    %v367 = vsel %vm278, %v274, 0
    %v370 = vsel %vm278, %v275, 0
    %v373 = vsel %vm278, %v276, 0
    %v376 = vsel %vm278, %v277, 0
    %378 = vmatprep.subr.bf16.mxu0 0
    %379 = vmatpush1.bf16.xpose.msra.mxu0 %v283
    %380 = vmatprep.subr.bf16.mxu0 0
    %381 = vmatpush1.bf16.xpose.msra.mxu0 %v286
    %382 = vmatprep.subr.bf16.mxu0 0
    %383 = vmatpush1.bf16.xpose.msra.mxu0 %v289
    %384 = vmatprep.subr.bf16.mxu0 0
    %385 = vmatpush1.bf16.xpose.msra.mxu0 %v292
    %386 = vmatprep.subr.bf16.mxu0 0
    %387 = vmatpush1.bf16.xpose.msra.mxu0 %v295
    %388 = vmatprep.subr.bf16.mxu0 0
    %389 = vmatpush1.bf16.xpose.msra.mxu0 %v298
    %390 = vmatprep.subr.bf16.mxu0 0
    %391 = vmatpush1.bf16.xpose.msra.mxu0 %v301
    %392 = vmatprep.subr.bf16.mxu0 0
    %393 = vmatpush1.bf16.xpose.msra.mxu0 %v304
    %394 = vmatprep.subr.bf16.mxu0 0
    %395 = vmatpush1.bf16.xpose.msra.mxu0 %v307
    %396 = vmatprep.subr.bf16.mxu0 0
    %397 = vmatpush1.bf16.xpose.msra.mxu0 %v310
    %398 = vmatprep.subr.bf16.mxu0 0
    %399 = vmatpush1.bf16.xpose.msra.mxu0 %v313
    %400 = vmatprep.subr.bf16.mxu0 0
    %401 = vmatpush1.bf16.xpose.msra.mxu0 %v316
    %402 = vmatprep.subr.bf16.mxu0 0
    %403 = vmatpush1.bf16.xpose.msra.mxu0 %v319
    %404 = vmatprep.subr.bf16.mxu0 0
    %405 = vmatpush1.bf16.xpose.msra.mxu0 %v322
    %406 = vmatprep.subr.bf16.mxu0 0
    %407 = vmatpush1.bf16.xpose.msra.mxu0 %v325
    %408 = vmatprep.subr.bf16.mxu0 0
    %409 = vmatpush1.bf16.xpose.msra.mxu0 %v328
    %410 = vmatprep.mubr.bf16.mxu0 0
    %411 = vmatmul.mubr.bf16.gmra.mrb[0].mxu0 %v280
    %v412 = vpop.f32.mrb[0].mxu0
    %v413 = vadd.f32 %v96, %v412
    %v414 = vpop.f32.mrb[0].mxu0
    %v415 = vadd.f32 %v100, %v414
    %v416 = vpop.f32.mrb[0].mxu0
    %v417 = vadd.f32 %v96, %v416
    %v418 = vpop.f32.mrb[0].mxu0
    %v419 = vadd.f32 %v100, %v418
    %420 = vdwg.mxu0
    %421 = vmatprep.subr.bf16.mxu0 0
    %422 = vmatpush1.bf16.xpose.msra.mxu0 %v331
    %423 = vmatprep.subr.bf16.mxu0 0
    %424 = vmatpush1.bf16.xpose.msra.mxu0 %v334
    %425 = vmatprep.subr.bf16.mxu0 0
    %426 = vmatpush1.bf16.xpose.msra.mxu0 %v337
    %427 = vmatprep.subr.bf16.mxu0 0
    %428 = vmatpush1.bf16.xpose.msra.mxu0 %v340
    %429 = vmatprep.subr.bf16.mxu0 0
    %430 = vmatpush1.bf16.xpose.msra.mxu0 %v343
    %431 = vmatprep.subr.bf16.mxu0 0
    %432 = vmatpush1.bf16.xpose.msra.mxu0 %v346
    %433 = vmatprep.subr.bf16.mxu0 0
    %434 = vmatpush1.bf16.xpose.msra.mxu0 %v349
    %435 = vmatprep.subr.bf16.mxu0 0
    %436 = vmatpush1.bf16.xpose.msra.mxu0 %v352
    %437 = vmatprep.subr.bf16.mxu0 0
    %438 = vmatpush1.bf16.xpose.msra.mxu0 %v355
    %439 = vmatprep.subr.bf16.mxu0 0
    %440 = vmatpush1.bf16.xpose.msra.mxu0 %v358
    %441 = vmatprep.subr.bf16.mxu0 0
    %442 = vmatpush1.bf16.xpose.msra.mxu0 %v361
    %443 = vmatprep.subr.bf16.mxu0 0
    %444 = vmatpush1.bf16.xpose.msra.mxu0 %v364
    %445 = vmatprep.subr.bf16.mxu0 0
    %446 = vmatpush1.bf16.xpose.msra.mxu0 %v367
    %447 = vmatprep.subr.bf16.mxu0 0
    %448 = vmatpush1.bf16.xpose.msra.mxu0 %v370
    %449 = vmatprep.subr.bf16.mxu0 0
    %450 = vmatpush1.bf16.xpose.msra.mxu0 %v373
    %451 = vmatprep.subr.bf16.mxu0 0
    %452 = vmatpush1.bf16.xpose.msra.mxu0 %v376
    %453 = vmatprep.mubr.bf16.mxu0 0
    %454 = vmatmul.mubr.bf16.gmra.mrb[0].mxu0 %v280
    %v455 = vpop.f32.mrb[0].mxu0
    %v456 = vadd.f32 %v104, %v455
    %v457 = vpop.f32.mrb[0].mxu0
    %v458 = vadd.f32 %v108, %v457
    %v459 = vpop.f32.mrb[0].mxu0
    %v460 = vadd.f32 %v104, %v459
    %v461 = vpop.f32.mrb[0].mxu0
    %v462 = vadd.f32 %v108, %v461
    %463 = vdwg.mxu0
    %s464 = smul.u32 0, 512
    %v465 = vlaneseq
    %v466 = vand.u32 %v465, 127
    %v467 = vadd.s32 %v466, 128
    %v468 = vadd.s32 %v466, 256
    %v469 = vadd.s32 %v466, 384
    %v470 = vstv %s464
    %v471 = vadd.s32 %v470, %v466
    %v472 = vadd.s32 %v470, %v467
    %v473 = vadd.s32 %v470, %v468
    %v474 = vadd.s32 %v470, %v469
    %vm475 = vcmp.lt.s32.totalorder %v471, 500
    %vm476 = vcmp.lt.s32.totalorder %v472, 500
    %vm477 = vcmp.lt.s32.totalorder %v473, 500
    %vm478 = vcmp.lt.s32.totalorder %v474, 500
    %v479 = vsel %vm475, %v413, -1e+30
    %v480 = vsel %vm476, %v415, -1e+30
    %v481 = vsel %vm477, %v456, -1e+30
    %v482 = vsel %vm478, %v458, -1e+30
    %v483 = vsel %vm475, %v417, -1e+30
    %v484 = vsel %vm476, %v419, -1e+30
    %v485 = vsel %vm477, %v460, -1e+30
    %v486 = vsel %vm478, %v462, -1e+30
    %v487 = vld [vmem:[#allocation2] sm:$0xff]
    %v488 = vld [vmem:[#allocation2 + $0x8] sm:$0xff]
    %v489 = vmax.f32 %v479, %v481
    %v490 = vmax.f32 %v480, %v482
    %v491 = vmax.f32 %v489, %v490
    %492 = vmax.xlane.f32.xlu0 %v491
    %v493 = vpop.xlane.xlu0 %492
    %v494 = vmax.f32 %v483, %v485
    %v495 = vmax.f32 %v484, %v486
    %v496 = vmax.f32 %v494, %v495
    %497 = vmax.xlane.f32.xlu0 %v496
    %v498 = vpop.xlane.xlu0 %497
    %v499 = vmax.f32 %v487, %v493
    %v500 = vmax.f32 %v488, %v498
    %v501 = vld [vmem:[#allocation3] sm:$0xff]
    %v502 = vld [vmem:[#allocation3 + $0x8] sm:$0xff]
    %v503 = vsub.f32 %v487, %v499
    %v504 = vsub.f32 %v488, %v500
    %v505 = vmul.f32 %v503, 1.442695
    %v506 = vpow.pop %v505
    %v507 = vmul.f32 %v504, 1.442695
    %v508 = vpow.pop %v507
    %v509 = vmul.f32 %v501, %v506
    %v510 = vmul.f32 %v502, %v508
    %512 = vset.pattern.permute.xlu0 0
    %513 = vperm.xlu0 %512, %v499
    %v514 = vpop.permute.xlu0 %513
    %517 = vset.pattern.permute.xlu0 0
    %518 = vperm.xlu0 %517, %v500
    %v519 = vpop.permute.xlu0 %518
    %v521 = vsub.f32 %v479, %v514
    %v522 = vsub.f32 %v480, %v514
    %v523 = vsub.f32 %v481, %v514
    %v524 = vsub.f32 %v482, %v514
    %v525 = vsub.f32 %v483, %v519
    %v526 = vsub.f32 %v484, %v519
    %v527 = vsub.f32 %v485, %v519
    %v528 = vsub.f32 %v486, %v519
    %v529 = vmul.f32 %v521, 1.442695
    %v530 = vpow.pop %v529
    %v531 = vmul.f32 %v522, 1.442695
    %v532 = vpow.pop %v531
    %v533 = vmul.f32 %v523, 1.442695
    %v534 = vpow.pop %v533
    %v535 = vmul.f32 %v524, 1.442695
    %v536 = vpow.pop %v535
    %v537 = vmul.f32 %v525, 1.442695
    %v538 = vpow.pop %v537
    %v539 = vmul.f32 %v526, 1.442695
    %v540 = vpow.pop %v539
    %v541 = vmul.f32 %v527, 1.442695
    %v542 = vpow.pop %v541
    %v543 = vmul.f32 %v528, 1.442695
    %v544 = vpow.pop %v543
    %v545 = vadd.f32 %v530, %v532
    %v546 = vadd.f32 %v545, %v534
    %v547 = vadd.f32 %v546, %v536
    %548 = vadd.xlane.f32.xlu0 %v547
    %v549 = vpop.xlane.xlu0 %548
    %v550 = vadd.f32 %v538, %v540
    %v551 = vadd.f32 %v550, %v542
    %v552 = vadd.f32 %v551, %v544
    %553 = vadd.xlane.f32.xlu0 %v552
    %v554 = vpop.xlane.xlu0 %553
    %v555 = vadd.f32 %v509, %v549
    %v556 = vadd.f32 %v510, %v554
    %vm557 = vcmask 7168
    %558 = vst.msk [vmem:[#allocation3] sm:$0xff] %vm557, %v555
    %559 = vst.msk [vmem:[#allocation3 + $0x8] sm:$0xff] %vm557, %v556
    %560 = vst.msk [vmem:[#allocation2] sm:$0xff] %vm557, %v499
    %561 = vst.msk [vmem:[#allocation2 + $0x8] sm:$0xff] %vm557, %v500
    %s562 = sshra.s32 %s464, 7
    %s563 = sand.u32 %s464, 127
    %s564 = smul.addr %s562, 8
    %s565 = scalar_lea.vmem [#allocation4], %s564
    %566 = vst [vmem:[%s565] sm:$0xff] %v479
    %567 = vst [vmem:[%s565 + $0x8] sm:$0xff] %v480
    %568 = vst [vmem:[%s565 + $0x10] sm:$0xff] %v481
    %569 = vst [vmem:[%s565 + $0x18] sm:$0xff] %v482
    %570 = vst [vmem:[%s565 + $0x20] sm:$0xff] %v483
    %571 = vst [vmem:[%s565 + $0x28] sm:$0xff] %v484
    %572 = vst [vmem:[%s565 + $0x30] sm:$0xff] %v485
    %573 = vst [vmem:[%s565 + $0x38] sm:$0xff] %v486
    // Predicated region
    $region18: #{tpu_custom_call.1} parent=1 // pred_check
      %p574 = pneg %p16
    $region19: #{tpu_custom_call.1} parent=1 // pred_check_branch
      %576 = sbr.rel (%p574) target = $region21
    $region20: #{tpu_custom_call.1} parent=1 // pred_region
      %v577 = vld [vmem:[#allocation2] sm:$0xff]
      %v578 = vld [vmem:[#allocation2 + $0x8] sm:$0xff]
      %v579 = vld [vmem:[#allocation3] sm:$0xff]
      %v580 = vld [vmem:[#allocation3 + $0x8] sm:$0xff]
      %v581 = vlog2.pop %v579
      %v582 = vmul.f32 %v581, 0.6931472
      %v583 = vlog2.pop %v580
      %v584 = vmul.f32 %v583, 0.6931472
      %v585 = vadd.f32 %v577, %v582
      %v586 = vadd.f32 %v578, %v584
      %v587 = vld [vmem:[#allocation4] sm:$0xff]
      %v588 = vld [vmem:[#allocation4 + $0x8] sm:$0xff]
      %v589 = vld [vmem:[#allocation4 + $0x10] sm:$0xff]
      %v590 = vld [vmem:[#allocation4 + $0x18] sm:$0xff]
      %v591 = vld [vmem:[#allocation4 + $0x20] sm:$0xff]
      %v592 = vld [vmem:[#allocation4 + $0x28] sm:$0xff]
      %v593 = vld [vmem:[#allocation4 + $0x30] sm:$0xff]
      %v594 = vld [vmem:[#allocation4 + $0x38] sm:$0xff]
      %596 = vset.pattern.permute.xlu0 0
      %597 = vperm.xlu0 %596, %v585
      %v598 = vpop.permute.xlu0 %597
      %601 = vset.pattern.permute.xlu0 0
      %602 = vperm.xlu0 %601, %v586
      %v603 = vpop.permute.xlu0 %602
      %v605 = vsub.f32 %v587, %v598
      %v606 = vsub.f32 %v588, %v598
      %v607 = vsub.f32 %v589, %v598
      %v608 = vsub.f32 %v590, %v598
      %v609 = vsub.f32 %v591, %v603
      %v610 = vsub.f32 %v592, %v603
      %v611 = vsub.f32 %v593, %v603
      %v612 = vsub.f32 %v594, %v603
      %613 = vst [vmem:[#allocation4] sm:$0xff] %v605
      %614 = vst [vmem:[#allocation4 + $0x8] sm:$0xff] %v606
      %615 = vst [vmem:[#allocation4 + $0x10] sm:$0xff] %v607
      %616 = vst [vmem:[#allocation4 + $0x18] sm:$0xff] %v608
      %617 = vst [vmem:[#allocation4 + $0x20] sm:$0xff] %v609
      %618 = vst [vmem:[#allocation4 + $0x28] sm:$0xff] %v610
      %619 = vst [vmem:[#allocation4 + $0x30] sm:$0xff] %v611
      %620 = vst [vmem:[#allocation4 + $0x38] sm:$0xff] %v612
    $region21: #{tpu_custom_call.1} parent=1 // pred_fallthru
      _
    // Predicated region
    $region22: #{tpu_custom_call.1} parent=1 // pred_check
      _
    $region23: #{tpu_custom_call.1} parent=1 // pred_check_branch
      %622 = sbr.rel (0) target = $region25
    $region24: #{tpu_custom_call.1} parent=1 // pred_region
      %s624 = ssub.s32 1024, 1024
      %625 = vsyncadd [#allocation5], %s624
      %s626 = sshll.u32 [#allocation4], 4
      %s627 = int_to_ptr.vmem [resolvable:$true] %s626
      %632 = dma.vmem_to_hbm [thread:$0]  %s627, 1024, %s3, [#allocation5], 512, 512, 32
    $region25: #{tpu_custom_call.1} parent=1 // pred_fallthru
      _
    // Predicated region
    $region26: #{tpu_custom_call.1} parent=1 // pred_check
      _
    $region27: #{tpu_custom_call.1} parent=1 // pred_check_branch
      %634 = sbr.rel (0) target = $region29
    $region28: #{tpu_custom_call.1} parent=1 // pred_region
      %635 = dma.done [#allocation5], 1024
    $region29: #{tpu_custom_call.1} parent=1 // pred_fallthru
      _
    %636 = vsyncpa [#allocation5], 1

</llo_original>
